<compile_context>
chip_gen: v6e
topology: v6e:2x2x1
jax: 0.10.0
libtpu: 0.0.40
codegen_flags: <defaults>
</compile_context>

<pallas_src>
from abc import ABC, abstractmethod

import jax
import jax.numpy as jnp
from jax.experimental import pallas as pl
from jax.experimental.pallas import tpu as pltpu

_LANES = 128            # vreg lane count: last dim of every block
_ACC_ROWS = 128         # accumulator rows per term -> 16 independent f32 vregs
_MAX_BLOCK_ROWS_OVERRIDE = None   # test hook: force small blocks / multi-step grids


def _cdiv(a, b):
    return -(-a // b)


def _round_up(a, b):
    return _cdiv(a, b) * b


def _tpu_info():
    try:
        return pltpu.get_tpu_info()
    except Exception:
        return None


def _tpu_vmem_capacity_bytes():
    info = _tpu_info()
    if info is not None:
        v = getattr(info, "vmem_capacity_bytes", None)
        try:
            if v is not None and int(v) > 0:
                return int(v)
        except (TypeError, ValueError):
            pass
    return 64 * 1024 * 1024   # conservative default (v7x per-TC VMEM)


def _tpu_num_tensorcores():
    info = _tpu_info()
    if info is not None:
        for attr in ("num_cores", "core_count", "num_tensorcores", "tensorcore_count"):
            v = getattr(info, attr, None)
            try:
                if v is not None and int(v) >= 1:
                    return int(v)
            except (TypeError, ValueError):
                continue
    return 1


# ----------------------------------------------------------------------------
# Fusable loss terms
# ----------------------------------------------------------------------------
class _PallasTerm:
    """One fusable loss term: an elementwise f32 contribution whose sum over all
    elements is produced by the shared streaming kernel, plus a scalar finalizer."""

    def elementwise(self, p_f32, t_f32):
        raise NotImplementedError

    def finalize(self, total_sum, n_elems):
        raise NotImplementedError


class _MSETerm(_PallasTerm):
    def elementwise(self, p_f32, t_f32):
        d = p_f32 - t_f32
        return d * d

    def finalize(self, total_sum, n_elems):
        return total_sum / jnp.float32(n_elems)


_MSE_TERM = _MSETerm()


def _dedup_terms(terms):
    """Merge repeated term objects (identical elementwise fn) by summing weights."""
    out, index_of = [], {}
    for w, t in terms:
        k = id(t)
        if k in index_of:
            j = index_of[k]
            out[j] = (out[j][0] + w, t)
        else:
            index_of[k] = len(out)
            out.append((w, t))
    return out


# ----------------------------------------------------------------------------
# Fused streaming-reduction kernel
# ----------------------------------------------------------------------------
def _fused_sums_pallas(p2d, t2d, term_objs):
    """Per-term sum of term.elementwise(p, t) over lane-dense (rows, 128) slabs,
    reading p/t from HBM exactly once.  Returns an (n_terms,) f32 array."""
    n_terms = len(term_objs)
    total_rows = p2d.shape[0]
    itemsize = max(jnp.dtype(p2d.dtype).itemsize, jnp.dtype(t2d.dtype).itemsize)

    # Generation-aware sizing: big-VMEM chips (v5e/v6e, 128 MiB) get 8 MiB input
    # buffers under a 64 MiB scoped limit; v7x (64 MiB/TC) / unknown chips get
    # 4 MiB buffers under the default-safe 32 MiB limit.
    if _tpu_vmem_capacity_bytes() >= 96 * 1024 * 1024:
        vmem_limit = 64 * 1024 * 1024
        target_buf_bytes = 8 * 1024 * 1024
    else:
        vmem_limit = 32 * 1024 * 1024
        target_buf_bytes = 4 * 1024 * 1024

    max_rows = max(
        _ACC_ROWS,
        (target_buf_bytes // (_LANES * itemsize)) // _ACC_ROWS * _ACC_ROWS,
    )
    if _MAX_BLOCK_ROWS_OVERRIDE is not None:
        max_rows = max(_ACC_ROWS,
                       _round_up(min(max_rows, _MAX_BLOCK_ROWS_OVERRIDE), _ACC_ROWS))
    block_rows = min(max_rows, _round_up(total_rows, _ACC_ROWS))
    total_blocks = _cdiv(total_rows, block_rows)

    # Only shard across TensorCores when the chip really has more than one.
    num_cores = _tpu_num_tensorcores()
    num_shards = 2 if (num_cores >= 2 and total_blocks >= 2) else 1
    steps = _cdiv(total_blocks, num_shards)
    needs_clamp = (num_shards * steps) != total_blocks
    needs_mask = needs_clamp or (total_rows % block_rows != 0)

    if needs_clamp:
        # Clamp the DMA'd block into bounds; the in-kernel edge mask zeroes the
        # (duplicate) contribution of logically-out-of-range steps.
        def in_idx(s, i):
            return (jnp.minimum(s * steps + i, total_blocks - 1), 0)
    else:
        def in_idx(s, i):
            return (s * steps + i, 0)

    def kernel(p_ref, t_ref, out_ref, acc_ref):
        s = pl.program_id(0)
        i = pl.program_id(1)

        @pl.when(i == 0)
        def _():
            acc_ref[...] = jnp.zeros_like(acc_ref)

        p = p_ref[...].astype(jnp.float32)
        t = t_ref[...].astype(jnp.float32)

        def accumulate(row_mask):
            for ti, term in enumerate(term_objs):
                v = term.elementwise(p, t)
                if row_mask is not None:
                    # select (NOT multiply): out-of-range rows hold garbage that
                    # may be inf/nan; 0 * garbage would poison the sum.
                    v = jnp.where(row_mask, v, 0.0)
                # Fold onto (128,128): 16 independent vreg add chains per term;
                # the expensive cross-lane reduce happens once, at the end.
                acc_ref[ti] += v.reshape(-1, _ACC_ROWS, _LANES).sum(axis=0)

        if needs_mask:
            logical_block = s * steps + i
            row0 = logical_block * block_rows
            is_edge = row0 + block_rows > total_rows  # partial or duplicate block

            @pl.when(jnp.logical_not(is_edge))
            def _():
                accumulate(None)

            @pl.when(is_edge)
            def _():
                row_iota = jax.lax.broadcasted_iota(jnp.int32, (block_rows, 1), 0)
                accumulate((row0 + row_iota) < total_rows)
        else:
            accumulate(None)

        @pl.when(i == pl.num_programs(1) - 1)
        def _():
            for ti in range(n_terms):
                out_ref[0, ti] = jnp.sum(acc_ref[ti])

    shard_sem = pltpu.CORE_PARALLEL if num_shards > 1 else pltpu.ARBITRARY
    partials = pl.pallas_call(
        kernel,
        out_shape=jax.ShapeDtypeStruct((num_shards, n_terms), jnp.float32),
        grid_spec=pltpu.PrefetchScalarGridSpec(
            num_scalar_prefetch=0,
            grid=(num_shards, steps),
            in_specs=[
                pl.BlockSpec((block_rows, _LANES), in_idx),
                pl.BlockSpec((block_rows, _LANES), in_idx),
            ],
            out_specs=pl.BlockSpec(
                (1, n_terms), lambda s, i: (s, 0), memory_space=pltpu.SMEM
            ),
            scratch_shapes=[pltpu.VMEM((n_terms, _ACC_ROWS, _LANES), jnp.float32)],
        ),
        compiler_params=pltpu.CompilerParams(
            dimension_semantics=(shard_sem, pltpu.ARBITRARY),
            vmem_limit_bytes=vmem_limit,
        ),
    )(p2d, t2d)
    return jnp.sum(partials, axis=0)


def _evaluate_fused_terms(terms, probs, targets):
    """Evaluate sum_i w_i * term_i(probs, targets) with one pass over HBM."""
    assert probs.shape == targets.shape, "probs/targets shape mismatch"
    terms = _dedup_terms(terms)
    term_objs = [t for _, t in terms]
    n = probs.size
    flat_p = probs.reshape(-1)
    flat_t = targets.reshape(-1)
    n_main = (n // _LANES) * _LANES   # lane-aligned prefix handled by the kernel

    sums = [jnp.float32(0.0)] * len(terms)
    if n_main > 0:
        if n_main == n:
            p2d = flat_p.reshape(-1, _LANES)
            t2d = flat_t.reshape(-1, _LANES)
        else:
            p2d = jax.lax.slice(flat_p, (0,), (n_main,)).reshape(-1, _LANES)
            t2d = jax.lax.slice(flat_t, (0,), (n_main,)).reshape(-1, _LANES)
        ksums = _fused_sums_pallas(p2d, t2d, term_objs)
        sums = [s + ksums[i] for i, s in enumerate(sums)]
    if n_main < n:
        # Tiny ragged tail (< 128 elems): plain JAX, avoids any pad/copy.
        pt = flat_p[n_main:].astype(jnp.float32)
        tt = flat_t[n_main:].astype(jnp.float32)
        sums = [s + jnp.sum(term.elementwise(pt, tt))
                for s, term in zip(sums, term_objs)]

    total = jnp.float32(0.0)
    for (w, term), s in zip(terms, sums):
        total = total + w * term.finalize(s, n)
    return total


def pallas_mse(probs, targets):
    """Mean squared error; the bulk reduction runs in the Pallas kernel."""
    return _evaluate_fused_terms([(1.0, _MSE_TERM)], probs, targets)


# ----------------------------------------------------------------------------
# AbstractLoss combinator algebra (the actual PyTorch module semantics)
# ----------------------------------------------------------------------------
class AbstractLoss(ABC):
    """JAX/Pallas port of losses/AbstractLoss.py.

    The abstract forward() carries no compute (it is `pass` in PyTorch); only
    the combinator algebra has semantics:
        (a + b)(p, t) == a(p, t) + b(p, t);   (a * s)(p, t) == s * a(p, t).
    Pallas-backed losses additionally expose `_pallas_terms()`, which lets the
    combinators fuse every term into a single HBM-streaming kernel.
    """

    @abstractmethod
    def forward(self, probs, targets):
        pass

    def __call__(self, probs, targets):
        return self.forward(probs, targets)

    def _pallas_terms(self):
        """[(weight, _PallasTerm)] if fusable into the shared kernel, else None."""
        return None

    def __add__(self, other):
        mine = self._pallas_terms()
        theirs = other._pallas_terms() if isinstance(other, AbstractLoss) else None
        if mine is not None and theirs is not None:
            return _FusedPallasLoss(mine + theirs)   # one kernel, one HBM pass

        outer_self = self

        class new_loss(AbstractLoss):
            def forward(self2, probs, targets):
                return outer_self.forward(probs, targets) + other.forward(
                    probs, targets
                )

        return new_loss()

    def __mul__(self, scalar):
        mine = self._pallas_terms()
        if mine is not None:
            return _FusedPallasLoss([(w * scalar, t) for w, t in mine])

        outer_self = self

        class new_loss(AbstractLoss):
            def forward(self2, probs, targets):
                # NOTE: the PyTorch source shadows `self` in the inner forward
                # (an infinite-recursion bug); we implement the intended
                # semantics: scalar * outer_loss.forward(probs, targets).
                return scalar * outer_self.forward(probs, targets)

        return new_loss()

    __rmul__ = __mul__


class _FusedPallasLoss(AbstractLoss):
    """Weighted sum of fusable terms evaluated by a single pallas_call."""

    def __init__(self, terms):
        self._terms = list(terms)

    def _pallas_terms(self):
        return list(self._terms)

    def forward(self, probs, targets):
        return _evaluate_fused_terms(self._terms, probs, targets)


class PallasMSELoss(AbstractLoss):
    """Concrete loss whose reduction runs in the fused Pallas kernel."""

    def _pallas_terms(self):
        return [(1.0, _MSE_TERM)]

    def forward(self, probs, targets):
        return _evaluate_fused_terms(self._pallas_terms(), probs, targets)


if __name__ == "__main__":
    key = jax.random.PRNGKey(0)
    kp, kt, kp2, kt2, kp3, kt3 = jax.random.split(key, 6)

    base = PallasMSELoss()

    # 1) Small NCHW input; combinator algebra (fused into ONE kernel):
    #    (mse + mse) * 0.5 == mse   and   2*mse + mse == 3*mse.
    probs = jax.random.uniform(kp, (2, 4, 16, 16), dtype=jnp.float32)
    targets = jax.random.uniform(kt, (2, 4, 16, 16), dtype=jnp.float32)
    ref = jnp.mean((probs - targets) ** 2)

    out = ((base + base) * 0.5)(probs, targets)
    jax.block_until_ready(out)
    assert jnp.allclose(out, ref, rtol=1e-4, atol=1e-6), (out, ref)

    out_w = (base * 2.0 + base)(probs, targets)
    jax.block_until_ready(out_w)
    assert jnp.allclose(out_w, 3.0 * ref, rtol=1e-4, atol=1e-6), (out_w, ref)

    # 2) Larger lane-aligned case: default (single big block) sizing, then the
    #    block-size override to force a multi-step accumulation grid.
    probs2 = jax.random.uniform(kp2, (2, 8, 128, 160), dtype=jnp.float32)
    targets2 = jax.random.uniform(kt2, (2, 8, 128, 160), dtype=jnp.float32)
    ref2 = jnp.mean((probs2 - targets2) ** 2)

    out2 = base(probs2, targets2)
    jax.block_until_ready(out2)
    assert jnp.allclose(out2, ref2, rtol=1e-4, atol=1e-6), (out2, ref2)

    _MAX_BLOCK_ROWS_OVERRIDE = 256          # 2560 rows -> 10 grid steps
    try:
        out2m = base(probs2, targets2)
        jax.block_until_ready(out2m)
    finally:
        _MAX_BLOCK_ROWS_OVERRIDE = None
    assert jnp.allclose(out2m, ref2, rtol=1e-4, atol=1e-6), (out2m, ref2)

    # 3) Ragged size (n % 128 != 0): exercises the in-kernel edge-row mask and
    #    the <128-element JAX tail.
    probs3 = jax.random.uniform(kp3, (3, 5, 7, 11), dtype=jnp.float32)
    targets3 = jax.random.uniform(kt3, (3, 5, 7, 11), dtype=jnp.float32)
    ref3 = jnp.mean((probs3 - targets3) ** 2)
    out3 = base(probs3, targets3)
    jax.block_until_ready(out3)
    assert jnp.allclose(out3, ref3, rtol=1e-4, atol=1e-6), (out3, ref3)

    # 4) bf16 inputs: halves HBM traffic, accumulated in f32 in-kernel.
    probs4 = probs2.astype(jnp.bfloat16)
    targets4 = targets2.astype(jnp.bfloat16)
    ref4 = jnp.mean((probs4.astype(jnp.float32) - targets4.astype(jnp.float32)) ** 2)
    out4 = base(probs4, targets4)
    jax.block_until_ready(out4)
    assert jnp.allclose(out4, ref4, rtol=1e-3, atol=1e-6), (out4, ref4)

    print("KERNEL_OK")
</pallas_src>

<mosaic_0001>
module attributes {stable_mosaic.version = 11 : i64} {
  func.func @kernel(%arg0: i32, %arg1: i32, %arg2: memref<128x128xf32, #tpu.memory_space<vmem>>, %arg3: memref<128x128xf32, #tpu.memory_space<vmem>>, %arg4: memref<1x1xf32, #tpu.memory_space<smem>>, %arg5: memref<1x128x128xf32, #tpu.memory_space<vmem>>) attributes {dimension_semantics = [#tpu.dimension_semantics<arbitrary>, #tpu.dimension_semantics<arbitrary>], iteration_bounds = array<i64: 1, 1>, scalar_prefetch = 0 : i64, scratch_operands = 1 : i64, tpu.core_type = #tpu.core_type<tc>, window_params = [{transform_indices = @transform_0, window_bounds = array<i64: 128, 128>}, {transform_indices = @transform_1, window_bounds = array<i64: 128, 128>}, {transform_indices = @transform_2, window_bounds = array<i64: 1, 1>}]} {
    %c0_i32 = arith.constant 0 : i32
    %0 = arith.cmpi eq, %arg1, %c0_i32 : i32
    %1 = arith.extui %0 : i1 to i32
    %c0_i32_0 = arith.constant 0 : i32
    %2 = arith.cmpi ne, %1, %c0_i32_0 : i32
    scf.if %2 {
      %cst = arith.constant 0.000000e+00 : f32
      %18 = vector.broadcast %cst : f32 to vector<1x128x128xf32>
      %c0_9 = arith.constant 0 : index
      %c0_10 = arith.constant 0 : index
      %c0_11 = arith.constant 0 : index
      %19 = vector.load %arg5[%c0_9, %c0_10, %c0_11] : memref<1x128x128xf32, #tpu.memory_space<vmem>>, vector<1x128x128xf32>
      tpu.vector_store %arg5[%c0_9, %c0_10, %c0_11], %18 {strides = array<i32>} : memref<1x128x128xf32, #tpu.memory_space<vmem>>, vector<1x128x128xf32>,
    } else {
    }
    %c0 = arith.constant 0 : index
    %c0_1 = arith.constant 0 : index
    %3 = vector.load %arg2[%c0, %c0_1] : memref<128x128xf32, #tpu.memory_space<vmem>>, vector<128x128xf32>
    %c0_2 = arith.constant 0 : index
    %c0_3 = arith.constant 0 : index
    %4 = vector.load %arg3[%c0_2, %c0_3] : memref<128x128xf32, #tpu.memory_space<vmem>>, vector<128x128xf32>
    %c1_i32 = arith.constant 1 : i32
    %5 = arith.muli %arg0, %c1_i32 : i32
    %6 = arith.addi %5, %arg1 : i32
    %c128_i32 = arith.constant 128 : i32
    %7 = arith.muli %6, %c128_i32 : i32
    %c128_i32_4 = arith.constant 128 : i32
    %8 = arith.addi %7, %c128_i32_4 : i32
    %c16_i32 = arith.constant 16 : i32
    %9 = arith.cmpi sgt, %8, %c16_i32 : i32
    %true = arith.constant true
    %10 = arith.xori %9, %true : i1
    %11 = arith.extui %10 : i1 to i32
    %c0_i32_5 = arith.constant 0 : i32
    %12 = arith.cmpi ne, %11, %c0_i32_5 : i32
    scf.if %12 {
      %18 = arith.subf %3, %4 : vector<128x128xf32>
      %19 = arith.mulf %18, %18 : vector<128x128xf32>
      %c0_9 = arith.constant 0 : index
      %c0_10 = arith.constant 0 : index
      %c0_11 = arith.constant 0 : index
      %20 = vector.load %arg5[%c0_9, %c0_10, %c0_11] : memref<1x128x128xf32, #tpu.memory_space<vmem>>, vector<1x128x128xf32>
      %21 = vector.shape_cast %20 : vector<1x128x128xf32> to vector<128x128xf32>
      %22 = vector.shape_cast %19 : vector<128x128xf32> to vector<1x128x128xf32>
      %cst = arith.constant dense<0.000000e+00> : vector<128x128xf32>
      %23 = vector.multi_reduction <add>, %22, %cst [0] : vector<1x128x128xf32> to vector<128x128xf32>
      %24 = arith.addf %21, %23 : vector<128x128xf32>
      %c0_12 = arith.constant 0 : index
      %c0_13 = arith.constant 0 : index
      %c0_14 = arith.constant 0 : index
      %25 = vector.load %arg5[%c0_12, %c0_13, %c0_14] : memref<1x128x128xf32, #tpu.memory_space<vmem>>, vector<1x128x128xf32>
      %26 = vector.shape_cast %25 : vector<1x128x128xf32> to vector<128x128xf32>
      %27 = vector.shape_cast %24 : vector<128x128xf32> to vector<1x128x128xf32>
      tpu.vector_store %arg5[%c0_12, %c0_13, %c0_14], %27 {strides = array<i32>} : memref<1x128x128xf32, #tpu.memory_space<vmem>>, vector<1x128x128xf32>,
    } else {
    }
    %13 = arith.extui %9 : i1 to i32
    %c0_i32_6 = arith.constant 0 : i32
    %14 = arith.cmpi ne, %13, %c0_i32_6 : i32
    scf.if %14 {
      %18 = tpu.iota {dimensions = array<i32: 0>} : vector<128x1xi32>
      %19 = vector.broadcast %7 : i32 to vector<128x1xi32>
      %20 = arith.addi %19, %18 : vector<128x1xi32>
      %c16_i32_9 = arith.constant 16 : i32
      %21 = vector.broadcast %c16_i32_9 : i32 to vector<128x1xi32>
      %22 = arith.cmpi slt, %20, %21 : vector<128x1xi32>
      %23 = arith.subf %3, %4 : vector<128x128xf32>
      %24 = arith.mulf %23, %23 : vector<128x128xf32>
      %cst = arith.constant 0.000000e+00 : f32
      %25 = vector.shape_cast %22 : vector<128x1xi1> to vector<128x1xi1>
      %26 = vector.broadcast %25 : vector<128x1xi1> to vector<128x128xi1>
      %27 = vector.broadcast %cst : f32 to vector<128x128xf32>
      %28 = arith.select %26, %24, %27 : vector<128x128xi1>, vector<128x128xf32>
      %c0_10 = arith.constant 0 : index
      %c0_11 = arith.constant 0 : index
      %c0_12 = arith.constant 0 : index
      %29 = vector.load %arg5[%c0_10, %c0_11, %c0_12] : memref<1x128x128xf32, #tpu.memory_space<vmem>>, vector<1x128x128xf32>
      %30 = vector.shape_cast %29 : vector<1x128x128xf32> to vector<128x128xf32>
      %31 = vector.shape_cast %28 : vector<128x128xf32> to vector<1x128x128xf32>
      %cst_13 = arith.constant dense<0.000000e+00> : vector<128x128xf32>
      %32 = vector.multi_reduction <add>, %31, %cst_13 [0] : vector<1x128x128xf32> to vector<128x128xf32>
      %33 = arith.addf %30, %32 : vector<128x128xf32>
      %c0_14 = arith.constant 0 : index
      %c0_15 = arith.constant 0 : index
      %c0_16 = arith.constant 0 : index
      %34 = vector.load %arg5[%c0_14, %c0_15, %c0_16] : memref<1x128x128xf32, #tpu.memory_space<vmem>>, vector<1x128x128xf32>
      %35 = vector.shape_cast %34 : vector<1x128x128xf32> to vector<128x128xf32>
      %36 = vector.shape_cast %33 : vector<128x128xf32> to vector<1x128x128xf32>
      tpu.vector_store %arg5[%c0_14, %c0_15, %c0_16], %36 {strides = array<i32>} : memref<1x128x128xf32, #tpu.memory_space<vmem>>, vector<1x128x128xf32>,
    } else {
    }
    %c0_i32_7 = arith.constant 0 : i32
    %15 = arith.cmpi eq, %arg1, %c0_i32_7 : i32
    %16 = arith.extui %15 : i1 to i32
    %c0_i32_8 = arith.constant 0 : i32
    %17 = arith.cmpi ne, %16, %c0_i32_8 : i32
    scf.if %17 {
      %c0_9 = arith.constant 0 : index
      %c0_10 = arith.constant 0 : index
      %c0_11 = arith.constant 0 : index
      %18 = vector.load %arg5[%c0_9, %c0_10, %c0_11] : memref<1x128x128xf32, #tpu.memory_space<vmem>>, vector<1x128x128xf32>
      %19 = vector.shape_cast %18 : vector<1x128x128xf32> to vector<128x128xf32>
      %20 = vector.shape_cast %19 : vector<128x128xf32> to vector<1x128x128xf32>
      %cst = arith.constant dense<0.000000e+00> : vector<1xf32>
      %21 = vector.multi_reduction <add>, %20, %cst [1, 2] : vector<1x128x128xf32> to vector<1xf32>
      %22 = vector.shape_cast %21 : vector<1xf32> to vector<1x1x1xf32>
      %23 = vector.extract %22[0, 0, 0] : f32 from vector<1x1x1xf32>
      %c0_12 = arith.constant 0 : index
      %c0_13 = arith.constant 0 : index
      %24 = memref.load %arg4[%c0_12, %c0_13] : memref<1x1xf32, #tpu.memory_space<smem>>
      memref.store %23, %arg4[%c0_12, %c0_13] : memref<1x1xf32, #tpu.memory_space<smem>>
    } else {
    }
    return
  }
  func.func @transform_0(%arg0: i32, %arg1: i32) -> (i32, i32) {
    %c1_i32 = arith.constant 1 : i32
    %0 = arith.muli %arg0, %c1_i32 : i32
    %1 = arith.addi %0, %arg1 : i32
    %c0_i32 = arith.constant 0 : i32
    %c0_i32_0 = arith.constant 0 : i32
    return %1, %c0_i32 : i32, i32
  }
  func.func @transform_1(%arg0: i32, %arg1: i32) -> (i32, i32) {
    %c1_i32 = arith.constant 1 : i32
    %0 = arith.muli %arg0, %c1_i32 : i32
    %1 = arith.addi %0, %arg1 : i32
    %c0_i32 = arith.constant 0 : i32
    %c0_i32_0 = arith.constant 0 : i32
    return %1, %c0_i32 : i32, i32
  }
  func.func @transform_2(%arg0: i32, %arg1: i32) -> (i32, i32) {
    %c0_i32 = arith.constant 0 : i32
    %c0_i32_0 = arith.constant 0 : i32
    return %arg0, %c0_i32 : i32, i32
  }
}

</mosaic_0001>

<llo_original>
// kernel: tpu_custom_call.1
$region0: #{tpu_custom_call.1}
  #allocation0 [shape = 'u32[]', space=smem, size = 0x4, offset = 0x4, fixed_abs, tag = 'smem constant byte address 0x4 - core index']
  #allocation1 [shape = 'u32[144,128]{1,0:T(1,128)}', space=vmem, size = 0x12000, scoped, tag = 'internal scratch']
  #allocation2 [shape = 'f32[1,128,128]{2,1,0:T(8,128)}', space=vmem, size = 0x10000, scoped, tag = 'scratch operand']
  %s0 = inlined_call_operand.hbm [shape: f32[16,128], index: 0, kind: input, shape index: {}]
  %s1 = inlined_call_operand.hbm [shape: f32[16,128], index: 1, kind: input, shape index: {}]
  %s2 = inlined_call_operand.hbm [shape: f32[1,1], index: 2, kind: output, shape index: {}]
  %s3 = sld [smem:[#allocation0]]
  $region42: #{tpu_custom_call.1} parent=0
    _
  %s5 = ssub.s32 1, %s3
  %s6 = scalar_select 0, %s5, %s3
  $region1: #{tpu_custom_call.1} parent=0
    #allocation3 [shape = 'u8[65536]{0}', space=vmem, size = 0x10000, scoped, tag = 'input window, operand 0, single buffered']
    #allocation4 [shape = 's32[1]{0}', space=sflag, size = 0x4, scoped, tag = 'scoped memory for tpu_custom_call.1']
    #allocation5 [shape = 's32[1]{0}', space=sflag, size = 0x4, scoped, tag = 'scoped memory for tpu_custom_call.1']
    #allocation6 [shape = 'u8[65536]{0}', space=vmem, size = 0x10000, scoped, tag = 'input window, operand 1, single buffered']
    #allocation7 [shape = 's32[1]{0}', space=sflag, size = 0x4, scoped, tag = 'scoped memory for tpu_custom_call.1']
    #allocation8 [shape = 'u8[512]{0}', space=smem, size = 0x200, scoped, tag = 'output window, operand 0, single buffered']
    %7 = vsyncpa [#allocation4], 0
    %8 = vsyncpa [#allocation7], 0
    %9 = vsyncpa [#allocation5], 0
    // Predicated region
    $region2: #{tpu_custom_call.1} parent=1 // pred_check
      _
    $region3: #{tpu_custom_call.1} parent=1 // pred_check_branch
      %11 = sbr.rel (0) target = $region5
    $region4: #{tpu_custom_call.1} parent=1 // pred_region
      %s12 = sadd.s32 0, 0
      %s13 = smul.u32 16, %s12
      %s14 = ssub.s32 2, %s13
      %s15 = smul.u32 128, %s14
      %s17 = ssub.s32 2048, %s15
      %18 = vsyncadd [#allocation4], %s17
      %p19 = scmp.ne.s32.totalorder 0, %s15
      %s20 = smul.addr %s13, 128
      %s21 = scalar_lea.hbm %s0, %s20
      %s22 = smul.u32 8, %s14
      %s23 = sshll.u32 [#allocation3], 4
      %s24 = int_to_ptr.vmem [resolvable:$true] %s23
      %s25 = sshll.u32 %s22, 4
      %29 = dma.hbm_to_vmem [thread:$0]  (%p19), %s21, %s25, %s24, [#allocation4], 128, 128, 8
    $region5: #{tpu_custom_call.1} parent=1 // pred_fallthru
      _
    // Predicated region
    $region6: #{tpu_custom_call.1} parent=1 // pred_check
      _
    $region7: #{tpu_custom_call.1} parent=1 // pred_check_branch
      %31 = sbr.rel (0) target = $region9
    $region8: #{tpu_custom_call.1} parent=1 // pred_region
      %s32 = sadd.s32 0, 0
      %s33 = smul.u32 16, %s32
      %s34 = ssub.s32 2, %s33
      %s35 = smul.u32 128, %s34
      %s37 = ssub.s32 2048, %s35
      %38 = vsyncadd [#allocation7], %s37
      %p39 = scmp.ne.s32.totalorder 0, %s35
      %s40 = smul.addr %s33, 128
      %s41 = scalar_lea.hbm %s1, %s40
      %s42 = smul.u32 8, %s34
      %s43 = sshll.u32 [#allocation6], 4
      %s44 = int_to_ptr.vmem [resolvable:$true] %s43
      %s45 = sshll.u32 %s42, 4
      %49 = dma.hbm_to_vmem [thread:$0]  (%p39), %s41, %s45, %s44, [#allocation7], 128, 128, 8
    $region9: #{tpu_custom_call.1} parent=1 // pred_fallthru
      _
    // Predicated region
    $region10: #{tpu_custom_call.1} parent=1 // pred_check
      _
    $region11: #{tpu_custom_call.1} parent=1 // pred_check_branch
      %51 = sbr.rel (0) target = $region13
    $region12: #{tpu_custom_call.1} parent=1 // pred_region
      %52 = dma.done [#allocation4], 2048
    $region13: #{tpu_custom_call.1} parent=1 // pred_fallthru
      _
    // Predicated region
    $region14: #{tpu_custom_call.1} parent=1 // pred_check
      _
    $region15: #{tpu_custom_call.1} parent=1 // pred_check_branch
      %54 = sbr.rel (0) target = $region17
    $region16: #{tpu_custom_call.1} parent=1 // pred_region
      %55 = dma.done [#allocation7], 2048
    $region17: #{tpu_custom_call.1} parent=1 // pred_fallthru
      _
    %s56 = sadd.s32 0, 0
    %s57 = smul.u32 16, %s56
    %s58 = ssub.s32 2, %s57
    %s59 = smul.u32 128, %s58
    %s60 = sadd.s32 0, 0
    %s61 = smul.u32 16, %s60
    %s62 = ssub.s32 2, %s61
    %s63 = smul.u32 128, %s62
    %p64 = scmp.eq.s32.totalorder 0, 0
    // Predicated region
    $region18: #{tpu_custom_call.1} parent=1 // pred_check
      %p65 = pneg %p64
    $region19: #{tpu_custom_call.1} parent=1 // pred_check_branch
      %67 = sbr.rel (%p65) target = $region21
    $region20: #{tpu_custom_call.1} parent=1 // pred_region
      %68 = vst [vmem:[#allocation2] sm:$0xff] 0.0
      %69 = vst [vmem:[#allocation2 + $0x8] sm:$0xff] 0.0
      %70 = vst [vmem:[#allocation2 + $0x10] sm:$0xff] 0.0
      %71 = vst [vmem:[#allocation2 + $0x18] sm:$0xff] 0.0
      %72 = vst [vmem:[#allocation2 + $0x20] sm:$0xff] 0.0
      %73 = vst [vmem:[#allocation2 + $0x28] sm:$0xff] 0.0
      %74 = vst [vmem:[#allocation2 + $0x30] sm:$0xff] 0.0
      %75 = vst [vmem:[#allocation2 + $0x38] sm:$0xff] 0.0
      %76 = vst [vmem:[#allocation2 + $0x40] sm:$0xff] 0.0
      %77 = vst [vmem:[#allocation2 + $0x48] sm:$0xff] 0.0
      %78 = vst [vmem:[#allocation2 + $0x50] sm:$0xff] 0.0
      %79 = vst [vmem:[#allocation2 + $0x58] sm:$0xff] 0.0
      %80 = vst [vmem:[#allocation2 + $0x60] sm:$0xff] 0.0
      %81 = vst [vmem:[#allocation2 + $0x68] sm:$0xff] 0.0
      %82 = vst [vmem:[#allocation2 + $0x70] sm:$0xff] 0.0
      %83 = vst [vmem:[#allocation2 + $0x78] sm:$0xff] 0.0
    $region21: #{tpu_custom_call.1} parent=1 // pred_fallthru
      _
    %v84 = vld [vmem:[#allocation3] sm:$0xff]
    %v85 = vld [vmem:[#allocation3 + $0x8] sm:$0xff]
    %v86 = vld [vmem:[#allocation3 + $0x10] sm:$0xff]
    %v87 = vld [vmem:[#allocation3 + $0x18] sm:$0xff]
    %v88 = vld [vmem:[#allocation3 + $0x20] sm:$0xff]
    %v89 = vld [vmem:[#allocation3 + $0x28] sm:$0xff]
    %v90 = vld [vmem:[#allocation3 + $0x30] sm:$0xff]
    %v91 = vld [vmem:[#allocation3 + $0x38] sm:$0xff]
    %v92 = vld [vmem:[#allocation3 + $0x40] sm:$0xff]
    %v93 = vld [vmem:[#allocation3 + $0x48] sm:$0xff]
    %v94 = vld [vmem:[#allocation3 + $0x50] sm:$0xff]
    %v95 = vld [vmem:[#allocation3 + $0x58] sm:$0xff]
    %v96 = vld [vmem:[#allocation3 + $0x60] sm:$0xff]
    %v97 = vld [vmem:[#allocation3 + $0x68] sm:$0xff]
    %v98 = vld [vmem:[#allocation3 + $0x70] sm:$0xff]
    %v99 = vld [vmem:[#allocation3 + $0x78] sm:$0xff]
    %v100 = vld [vmem:[#allocation6] sm:$0xff]
    %v101 = vld [vmem:[#allocation6 + $0x8] sm:$0xff]
    %v102 = vld [vmem:[#allocation6 + $0x10] sm:$0xff]
    %v103 = vld [vmem:[#allocation6 + $0x18] sm:$0xff]
    %v104 = vld [vmem:[#allocation6 + $0x20] sm:$0xff]
    %v105 = vld [vmem:[#allocation6 + $0x28] sm:$0xff]
    %v106 = vld [vmem:[#allocation6 + $0x30] sm:$0xff]
    %v107 = vld [vmem:[#allocation6 + $0x38] sm:$0xff]
    %v108 = vld [vmem:[#allocation6 + $0x40] sm:$0xff]
    %v109 = vld [vmem:[#allocation6 + $0x48] sm:$0xff]
    %v110 = vld [vmem:[#allocation6 + $0x50] sm:$0xff]
    %v111 = vld [vmem:[#allocation6 + $0x58] sm:$0xff]
    %v112 = vld [vmem:[#allocation6 + $0x60] sm:$0xff]
    %v113 = vld [vmem:[#allocation6 + $0x68] sm:$0xff]
    %v114 = vld [vmem:[#allocation6 + $0x70] sm:$0xff]
    %v115 = vld [vmem:[#allocation6 + $0x78] sm:$0xff]
    %s116 = sadd.s32 0, 0
    %s117 = smul.u32 %s116, 128
    %s118 = sadd.s32 %s117, 128
    %p119 = scmp.gt.s32.totalorder %s118, 16
    %p120 = scmp.le.s32.totalorder %s118, 16
    // Predicated region
    $region22: #{tpu_custom_call.1} parent=1 // pred_check
      %p121 = pneg %p120
    $region23: #{tpu_custom_call.1} parent=1 // pred_check_branch
      %123 = sbr.rel (%p121) target = $region25
    $region24: #{tpu_custom_call.1} parent=1 // pred_region
      %v124 = vsub.f32 %v84, %v100
      %v125 = vsub.f32 %v85, %v101
      %v126 = vsub.f32 %v86, %v102
      %v127 = vsub.f32 %v87, %v103
      %v128 = vsub.f32 %v88, %v104
      %v129 = vsub.f32 %v89, %v105
      %v130 = vsub.f32 %v90, %v106
      %v131 = vsub.f32 %v91, %v107
      %v132 = vsub.f32 %v92, %v108
      %v133 = vsub.f32 %v93, %v109
      %v134 = vsub.f32 %v94, %v110
      %v135 = vsub.f32 %v95, %v111
      %v136 = vsub.f32 %v96, %v112
      %v137 = vsub.f32 %v97, %v113
      %v138 = vsub.f32 %v98, %v114
      %v139 = vsub.f32 %v99, %v115
      %v140 = vmul.f32 %v124, %v124
      %v141 = vmul.f32 %v125, %v125
      %v142 = vmul.f32 %v126, %v126
      %v143 = vmul.f32 %v127, %v127
      %v144 = vmul.f32 %v128, %v128
      %v145 = vmul.f32 %v129, %v129
      %v146 = vmul.f32 %v130, %v130
      %v147 = vmul.f32 %v131, %v131
      %v148 = vmul.f32 %v132, %v132
      %v149 = vmul.f32 %v133, %v133
      %v150 = vmul.f32 %v134, %v134
      %v151 = vmul.f32 %v135, %v135
      %v152 = vmul.f32 %v136, %v136
      %v153 = vmul.f32 %v137, %v137
      %v154 = vmul.f32 %v138, %v138
      %v155 = vmul.f32 %v139, %v139
      %v156 = vld [vmem:[#allocation2] sm:$0xff]
      %v157 = vld [vmem:[#allocation2 + $0x8] sm:$0xff]
      %v158 = vld [vmem:[#allocation2 + $0x10] sm:$0xff]
      %v159 = vld [vmem:[#allocation2 + $0x18] sm:$0xff]
      %v160 = vld [vmem:[#allocation2 + $0x20] sm:$0xff]
      %v161 = vld [vmem:[#allocation2 + $0x28] sm:$0xff]
      %v162 = vld [vmem:[#allocation2 + $0x30] sm:$0xff]
      %v163 = vld [vmem:[#allocation2 + $0x38] sm:$0xff]
      %v164 = vld [vmem:[#allocation2 + $0x40] sm:$0xff]
      %v165 = vld [vmem:[#allocation2 + $0x48] sm:$0xff]
      %v166 = vld [vmem:[#allocation2 + $0x50] sm:$0xff]
      %v167 = vld [vmem:[#allocation2 + $0x58] sm:$0xff]
      %v168 = vld [vmem:[#allocation2 + $0x60] sm:$0xff]
      %v169 = vld [vmem:[#allocation2 + $0x68] sm:$0xff]
      %v170 = vld [vmem:[#allocation2 + $0x70] sm:$0xff]
      %v171 = vld [vmem:[#allocation2 + $0x78] sm:$0xff]
      %v172 = vadd.f32 %v140, 0.0
      %v173 = vadd.f32 %v141, 0.0
      %v174 = vadd.f32 %v142, 0.0
      %v175 = vadd.f32 %v143, 0.0
      %v176 = vadd.f32 %v144, 0.0
      %v177 = vadd.f32 %v145, 0.0
      %v178 = vadd.f32 %v146, 0.0
      %v179 = vadd.f32 %v147, 0.0
      %v180 = vadd.f32 %v148, 0.0
      %v181 = vadd.f32 %v149, 0.0
      %v182 = vadd.f32 %v150, 0.0
      %v183 = vadd.f32 %v151, 0.0
      %v184 = vadd.f32 %v152, 0.0
      %v185 = vadd.f32 %v153, 0.0
      %v186 = vadd.f32 %v154, 0.0
      %v187 = vadd.f32 %v155, 0.0
      %v188 = vadd.f32 %v156, %v172
      %v189 = vadd.f32 %v157, %v173
      %v190 = vadd.f32 %v158, %v174
      %v191 = vadd.f32 %v159, %v175
      %v192 = vadd.f32 %v160, %v176
      %v193 = vadd.f32 %v161, %v177
      %v194 = vadd.f32 %v162, %v178
      %v195 = vadd.f32 %v163, %v179
      %v196 = vadd.f32 %v164, %v180
      %v197 = vadd.f32 %v165, %v181
      %v198 = vadd.f32 %v166, %v182
      %v199 = vadd.f32 %v167, %v183
      %v200 = vadd.f32 %v168, %v184
      %v201 = vadd.f32 %v169, %v185
      %v202 = vadd.f32 %v170, %v186
      %v203 = vadd.f32 %v171, %v187
      %204 = vst [vmem:[#allocation2] sm:$0xff] %v188
      %205 = vst [vmem:[#allocation2 + $0x8] sm:$0xff] %v189
      %206 = vst [vmem:[#allocation2 + $0x10] sm:$0xff] %v190
      %207 = vst [vmem:[#allocation2 + $0x18] sm:$0xff] %v191
      %208 = vst [vmem:[#allocation2 + $0x20] sm:$0xff] %v192
      %209 = vst [vmem:[#allocation2 + $0x28] sm:$0xff] %v193
      %210 = vst [vmem:[#allocation2 + $0x30] sm:$0xff] %v194
      %211 = vst [vmem:[#allocation2 + $0x38] sm:$0xff] %v195
      %212 = vst [vmem:[#allocation2 + $0x40] sm:$0xff] %v196
      %213 = vst [vmem:[#allocation2 + $0x48] sm:$0xff] %v197
      %214 = vst [vmem:[#allocation2 + $0x50] sm:$0xff] %v198
      %215 = vst [vmem:[#allocation2 + $0x58] sm:$0xff] %v199
      %216 = vst [vmem:[#allocation2 + $0x60] sm:$0xff] %v200
      %217 = vst [vmem:[#allocation2 + $0x68] sm:$0xff] %v201
      %218 = vst [vmem:[#allocation2 + $0x70] sm:$0xff] %v202
      %219 = vst [vmem:[#allocation2 + $0x78] sm:$0xff] %v203
    $region25: #{tpu_custom_call.1} parent=1 // pred_fallthru
      _
    // Predicated region
    $region26: #{tpu_custom_call.1} parent=1 // pred_check
      %p220 = pneg %p119
    $region27: #{tpu_custom_call.1} parent=1 // pred_check_branch
      %222 = sbr.rel (%p220) target = $region29
    $region28: #{tpu_custom_call.1} parent=1 // pred_region
      %v223 = vlaneseq
      %v224 = vshrl.u32 %v223, 7
      %v225 = vadd.s32 %v224, 8
      %v226 = vadd.s32 %v224, 16
      %v227 = vadd.s32 %v224, 24
      %v228 = vadd.s32 %v224, 32
      %v229 = vadd.s32 %v224, 40
      %v230 = vadd.s32 %v224, 48
      %v231 = vadd.s32 %v224, 56
      %v232 = vadd.s32 %v224, 64
      %v233 = vadd.s32 %v224, 72
      %v234 = vadd.s32 %v224, 80
      %v235 = vadd.s32 %v224, 88
      %v236 = vadd.s32 %v224, 96
      %v237 = vadd.s32 %v224, 104
      %v238 = vadd.s32 %v224, 112
      %v239 = vadd.s32 %v224, 120
      %v240 = vstv %s117
      %v241 = vadd.s32 %v240, %v224
      %v242 = vadd.s32 %v240, %v225
      %v243 = vadd.s32 %v240, %v226
      %v244 = vadd.s32 %v240, %v227
      %v245 = vadd.s32 %v240, %v228
      %v246 = vadd.s32 %v240, %v229
      %v247 = vadd.s32 %v240, %v230
      %v248 = vadd.s32 %v240, %v231
      %v249 = vadd.s32 %v240, %v232
      %v250 = vadd.s32 %v240, %v233
      %v251 = vadd.s32 %v240, %v234
      %v252 = vadd.s32 %v240, %v235
      %v253 = vadd.s32 %v240, %v236
      %v254 = vadd.s32 %v240, %v237
      %v255 = vadd.s32 %v240, %v238
      %v256 = vadd.s32 %v240, %v239
      %vm257 = vcmp.lt.s32.totalorder %v241, 16
      %vm258 = vcmp.lt.s32.totalorder %v242, 16
      %vm259 = vcmp.lt.s32.totalorder %v243, 16
      %vm260 = vcmp.lt.s32.totalorder %v244, 16
      %vm261 = vcmp.lt.s32.totalorder %v245, 16
      %vm262 = vcmp.lt.s32.totalorder %v246, 16
      %vm263 = vcmp.lt.s32.totalorder %v247, 16
      %vm264 = vcmp.lt.s32.totalorder %v248, 16
      %vm265 = vcmp.lt.s32.totalorder %v249, 16
      %vm266 = vcmp.lt.s32.totalorder %v250, 16
      %vm267 = vcmp.lt.s32.totalorder %v251, 16
      %vm268 = vcmp.lt.s32.totalorder %v252, 16
      %vm269 = vcmp.lt.s32.totalorder %v253, 16
      %vm270 = vcmp.lt.s32.totalorder %v254, 16
      %vm271 = vcmp.lt.s32.totalorder %v255, 16
      %vm272 = vcmp.lt.s32.totalorder %v256, 16
      %v273 = vsub.f32 %v84, %v100
      %v274 = vsub.f32 %v85, %v101
      %v275 = vsub.f32 %v86, %v102
      %v276 = vsub.f32 %v87, %v103
      %v277 = vsub.f32 %v88, %v104
      %v278 = vsub.f32 %v89, %v105
      %v279 = vsub.f32 %v90, %v106
      %v280 = vsub.f32 %v91, %v107
      %v281 = vsub.f32 %v92, %v108
      %v282 = vsub.f32 %v93, %v109
      %v283 = vsub.f32 %v94, %v110
      %v284 = vsub.f32 %v95, %v111
      %v285 = vsub.f32 %v96, %v112
      %v286 = vsub.f32 %v97, %v113
      %v287 = vsub.f32 %v98, %v114
      %v288 = vsub.f32 %v99, %v115
      %v289 = vmul.f32 %v273, %v273
      %v290 = vmul.f32 %v274, %v274
      %v291 = vmul.f32 %v275, %v275
      %v292 = vmul.f32 %v276, %v276
      %v293 = vmul.f32 %v277, %v277
      %v294 = vmul.f32 %v278, %v278
      %v295 = vmul.f32 %v279, %v279
      %v296 = vmul.f32 %v280, %v280
      %v297 = vmul.f32 %v281, %v281
      %v298 = vmul.f32 %v282, %v282
      %v299 = vmul.f32 %v283, %v283
      %v300 = vmul.f32 %v284, %v284
      %v301 = vmul.f32 %v285, %v285
      %v302 = vmul.f32 %v286, %v286
      %v303 = vmul.f32 %v287, %v287
      %v304 = vmul.f32 %v288, %v288
      %v305 = vsel %vm257, 1, 0
      %v306 = vsel %vm258, 1, 0
      %v307 = vsel %vm259, 1, 0
      %v308 = vsel %vm260, 1, 0
      %v309 = vsel %vm261, 1, 0
      %v310 = vsel %vm262, 1, 0
      %v311 = vsel %vm263, 1, 0
      %v312 = vsel %vm264, 1, 0
      %v313 = vsel %vm265, 1, 0
      %v314 = vsel %vm266, 1, 0
      %v315 = vsel %vm267, 1, 0
      %v316 = vsel %vm268, 1, 0
      %v317 = vsel %vm269, 1, 0
      %v318 = vsel %vm270, 1, 0
      %v319 = vsel %vm271, 1, 0
      %v320 = vsel %vm272, 1, 0
      %vm321 = vcmp.eq.s32.totalorder %v305, 1
      %vm322 = vcmp.eq.s32.totalorder %v306, 1
      %vm323 = vcmp.eq.s32.totalorder %v307, 1
      %vm324 = vcmp.eq.s32.totalorder %v308, 1
      %vm325 = vcmp.eq.s32.totalorder %v309, 1
      %vm326 = vcmp.eq.s32.totalorder %v310, 1
      %vm327 = vcmp.eq.s32.totalorder %v311, 1
      %vm328 = vcmp.eq.s32.totalorder %v312, 1
      %vm329 = vcmp.eq.s32.totalorder %v313, 1
      %vm330 = vcmp.eq.s32.totalorder %v314, 1
      %vm331 = vcmp.eq.s32.totalorder %v315, 1
      %vm332 = vcmp.eq.s32.totalorder %v316, 1
      %vm333 = vcmp.eq.s32.totalorder %v317, 1
      %vm334 = vcmp.eq.s32.totalorder %v318, 1
      %vm335 = vcmp.eq.s32.totalorder %v319, 1
      %vm336 = vcmp.eq.s32.totalorder %v320, 1
      %v337 = vsel %vm321, %v289, 0.0
      %v338 = vsel %vm322, %v290, 0.0
      %v339 = vsel %vm323, %v291, 0.0
      %v340 = vsel %vm324, %v292, 0.0
      %v341 = vsel %vm325, %v293, 0.0
      %v342 = vsel %vm326, %v294, 0.0
      %v343 = vsel %vm327, %v295, 0.0
      %v344 = vsel %vm328, %v296, 0.0
      %v345 = vsel %vm329, %v297, 0.0
      %v346 = vsel %vm330, %v298, 0.0
      %v347 = vsel %vm331, %v299, 0.0
      %v348 = vsel %vm332, %v300, 0.0
      %v349 = vsel %vm333, %v301, 0.0
      %v350 = vsel %vm334, %v302, 0.0
      %v351 = vsel %vm335, %v303, 0.0
      %v352 = vsel %vm336, %v304, 0.0
      %v353 = vld [vmem:[#allocation2] sm:$0xff]
      %v354 = vld [vmem:[#allocation2 + $0x8] sm:$0xff]
      %v355 = vld [vmem:[#allocation2 + $0x10] sm:$0xff]
      %v356 = vld [vmem:[#allocation2 + $0x18] sm:$0xff]
      %v357 = vld [vmem:[#allocation2 + $0x20] sm:$0xff]
      %v358 = vld [vmem:[#allocation2 + $0x28] sm:$0xff]
      %v359 = vld [vmem:[#allocation2 + $0x30] sm:$0xff]
      %v360 = vld [vmem:[#allocation2 + $0x38] sm:$0xff]
      %v361 = vld [vmem:[#allocation2 + $0x40] sm:$0xff]
      %v362 = vld [vmem:[#allocation2 + $0x48] sm:$0xff]
      %v363 = vld [vmem:[#allocation2 + $0x50] sm:$0xff]
      %v364 = vld [vmem:[#allocation2 + $0x58] sm:$0xff]
      %v365 = vld [vmem:[#allocation2 + $0x60] sm:$0xff]
      %v366 = vld [vmem:[#allocation2 + $0x68] sm:$0xff]
      %v367 = vld [vmem:[#allocation2 + $0x70] sm:$0xff]
      %v368 = vld [vmem:[#allocation2 + $0x78] sm:$0xff]
      %v369 = vadd.f32 %v337, 0.0
      %v370 = vadd.f32 %v338, 0.0
      %v371 = vadd.f32 %v339, 0.0
      %v372 = vadd.f32 %v340, 0.0
      %v373 = vadd.f32 %v341, 0.0
      %v374 = vadd.f32 %v342, 0.0
      %v375 = vadd.f32 %v343, 0.0
      %v376 = vadd.f32 %v344, 0.0
      %v377 = vadd.f32 %v345, 0.0
      %v378 = vadd.f32 %v346, 0.0
      %v379 = vadd.f32 %v347, 0.0
      %v380 = vadd.f32 %v348, 0.0
      %v381 = vadd.f32 %v349, 0.0
      %v382 = vadd.f32 %v350, 0.0
      %v383 = vadd.f32 %v351, 0.0
      %v384 = vadd.f32 %v352, 0.0
      %v385 = vadd.f32 %v353, %v369
      %v386 = vadd.f32 %v354, %v370
      %v387 = vadd.f32 %v355, %v371
      %v388 = vadd.f32 %v356, %v372
      %v389 = vadd.f32 %v357, %v373
      %v390 = vadd.f32 %v358, %v374
      %v391 = vadd.f32 %v359, %v375
      %v392 = vadd.f32 %v360, %v376
      %v393 = vadd.f32 %v361, %v377
      %v394 = vadd.f32 %v362, %v378
      %v395 = vadd.f32 %v363, %v379
      %v396 = vadd.f32 %v364, %v380
      %v397 = vadd.f32 %v365, %v381
      %v398 = vadd.f32 %v366, %v382
      %v399 = vadd.f32 %v367, %v383
      %v400 = vadd.f32 %v368, %v384
      %401 = vst [vmem:[#allocation2] sm:$0xff] %v385
      %402 = vst [vmem:[#allocation2 + $0x8] sm:$0xff] %v386
      %403 = vst [vmem:[#allocation2 + $0x10] sm:$0xff] %v387
      %404 = vst [vmem:[#allocation2 + $0x18] sm:$0xff] %v388
      %405 = vst [vmem:[#allocation2 + $0x20] sm:$0xff] %v389
      %406 = vst [vmem:[#allocation2 + $0x28] sm:$0xff] %v390
      %407 = vst [vmem:[#allocation2 + $0x30] sm:$0xff] %v391
      %408 = vst [vmem:[#allocation2 + $0x38] sm:$0xff] %v392
      %409 = vst [vmem:[#allocation2 + $0x40] sm:$0xff] %v393
      %410 = vst [vmem:[#allocation2 + $0x48] sm:$0xff] %v394
      %411 = vst [vmem:[#allocation2 + $0x50] sm:$0xff] %v395
      %412 = vst [vmem:[#allocation2 + $0x58] sm:$0xff] %v396
      %413 = vst [vmem:[#allocation2 + $0x60] sm:$0xff] %v397
      %414 = vst [vmem:[#allocation2 + $0x68] sm:$0xff] %v398
      %415 = vst [vmem:[#allocation2 + $0x70] sm:$0xff] %v399
      %416 = vst [vmem:[#allocation2 + $0x78] sm:$0xff] %v400
    $region29: #{tpu_custom_call.1} parent=1 // pred_fallthru
      _
    // Predicated region
    $region30: #{tpu_custom_call.1} parent=1 // pred_check
      %p417 = pneg %p64
    $region31: #{tpu_custom_call.1} parent=1 // pred_check_branch
      %419 = sbr.rel (%p417) target = $region33
    $region32: #{tpu_custom_call.1} parent=1 // pred_region
      %v420 = vld [vmem:[#allocation2] sm:$0xff]
      %v421 = vld [vmem:[#allocation2 + $0x8] sm:$0xff]
      %v422 = vld [vmem:[#allocation2 + $0x10] sm:$0xff]
      %v423 = vld [vmem:[#allocation2 + $0x18] sm:$0xff]
      %v424 = vld [vmem:[#allocation2 + $0x20] sm:$0xff]
      %v425 = vld [vmem:[#allocation2 + $0x28] sm:$0xff]
      %v426 = vld [vmem:[#allocation2 + $0x30] sm:$0xff]
      %v427 = vld [vmem:[#allocation2 + $0x38] sm:$0xff]
      %v428 = vld [vmem:[#allocation2 + $0x40] sm:$0xff]
      %v429 = vld [vmem:[#allocation2 + $0x48] sm:$0xff]
      %v430 = vld [vmem:[#allocation2 + $0x50] sm:$0xff]
      %v431 = vld [vmem:[#allocation2 + $0x58] sm:$0xff]
      %v432 = vld [vmem:[#allocation2 + $0x60] sm:$0xff]
      %v433 = vld [vmem:[#allocation2 + $0x68] sm:$0xff]
      %v434 = vld [vmem:[#allocation2 + $0x70] sm:$0xff]
      %v435 = vld [vmem:[#allocation2 + $0x78] sm:$0xff]
      %v436 = vadd.f32 %v420, %v421
      %v437 = vadd.f32 %v436, %v422
      %v438 = vadd.f32 %v437, %v423
      %v439 = vadd.f32 %v438, %v424
      %v440 = vadd.f32 %v439, %v425
      %v441 = vadd.f32 %v440, %v426
      %v442 = vadd.f32 %v441, %v427
      %v443 = vadd.f32 %v442, %v428
      %v444 = vadd.f32 %v443, %v429
      %v445 = vadd.f32 %v444, %v430
      %v446 = vadd.f32 %v445, %v431
      %v447 = vadd.f32 %v446, %v432
      %v448 = vadd.f32 %v447, %v433
      %v449 = vadd.f32 %v448, %v434
      %v450 = vadd.f32 %v449, %v435
      %451 = vadd.xlane.f32.xlu0 %v450
      %v452 = vpop.xlane.xlu0 %451
      %v453 = vrot.slane %v452, 4
      %v454 = vadd.f32 %v452, %v453
      %v455 = vrot.slane %v454, 2
      %v456 = vadd.f32 %v454, %v455
      %v457 = vrot.slane %v456, 1
      %v458 = vadd.f32 %v456, %v457
      %s459 = vtos %v458
      %s460 = scalar_lea.smem [#allocation8], 0
      %461 = sst [smem:[%s460]] %s459
    $region33: #{tpu_custom_call.1} parent=1 // pred_fallthru
      _
    // Predicated region
    $region34: #{tpu_custom_call.1} parent=1 // pred_check
      _
    $region35: #{tpu_custom_call.1} parent=1 // pred_check_branch
      %463 = sbr.rel (0) target = $region37
    $region36: #{tpu_custom_call.1} parent=1 // pred_region
      %s465 = ssub.s32 16, 16
      %466 = vsyncadd [#allocation5], %s465
      %469 = dma.smem_to_hbm [#allocation8], 16, %s2, [#allocation5]
    $region37: #{tpu_custom_call.1} parent=1 // pred_fallthru
      _
    // Predicated region
    $region38: #{tpu_custom_call.1} parent=1 // pred_check
      _
    $region39: #{tpu_custom_call.1} parent=1 // pred_check_branch
      %471 = sbr.rel (0) target = $region41
    $region40: #{tpu_custom_call.1} parent=1 // pred_region
      %472 = dma.done [#allocation5], 16
    $region41: #{tpu_custom_call.1} parent=1 // pred_fallthru
      _
    %473 = sfence
    %474 = vsyncpa [#allocation4], 1
    %475 = vsyncpa [#allocation7], 1
    %476 = vsyncpa [#allocation5], 1

</llo_original>
